<compile_context>
chip_gen: v7x
topology: tpu7x:2x2x1
jax: 0.10.0
libtpu: 0.0.40
codegen_flags: <defaults>
</compile_context>

<pallas_src>
import jax
import jax.numpy as jnp
from jax.experimental import pallas as pl
from jax.experimental.pallas import tpu as pltpu


def _expand_kernel(z_ref, o_ref):
    # z_ref: (TILE_ROWS, 1) slice of the flattened latent, in VMEM.
    # o_ref: (TILE_ROWS, W*H) lane-dense output tile.
    o_ref[...] = jnp.broadcast_to(z_ref[...], o_ref.shape).astype(o_ref.dtype)


def expand_latent_space(z, width: int, height: int):
    """z: (B, C) float array -> (B, C, width, height) broadcast."""
    B, C = z.shape
    rows = B * C
    cols = width * height
    dtype_bytes = jnp.dtype(z.dtype).itemsize

    # Pick TILE_ROWS so one output tile is ~2 MiB (amortizes ~0.35 us/step
    # pipeline overhead, keeps double-buffered VMEM small enough for v7x).
    target_tile_bytes = 2 * 1024 * 1024
    tr = max(1, target_tile_bytes // max(1, cols * dtype_bytes))
    tr = max(8, (tr // 8) * 8)          # multiple of 8 for the sublane rule
    if tr >= rows:
        tile_rows = rows                # full-extent block is always legal
    else:
        tile_rows = tr

    grid = (pl.cdiv(rows, tile_rows),)

    z_flat = z.reshape(rows, 1)

    out_flat = pl.pallas_call(
        _expand_kernel,
        out_shape=jax.ShapeDtypeStruct((rows, cols), z.dtype),
        grid_spec=pltpu.PrefetchScalarGridSpec(
            num_scalar_prefetch=0,
            grid=grid,
            in_specs=[
                pl.BlockSpec((tile_rows, 1), lambda i: (i, 0)),
            ],
            out_specs=pl.BlockSpec((tile_rows, cols), lambda i: (i, 0)),
        ),
        compiler_params=pltpu.CompilerParams(
            dimension_semantics=("parallel",),
        ),
        cost_estimate=pl.CostEstimate(
            flops=0,
            transcendentals=0,
            bytes_accessed=rows * cols * dtype_bytes + rows * dtype_bytes,
        ),
    )(z_flat)

    # Contiguous NCHW view of the (B*C, W*H) slab — matches PyTorch layout.
    return out_flat.reshape(B, C, width, height)


if __name__ == "__main__":
    # Small shapes consistent with the module: batch=2, latent channels=4,
    # expand to width=16, height=16.
    B, C = 2, 4
    WIDTH, HEIGHT = 16, 16

    key = jax.random.PRNGKey(0)
    z = jax.random.normal(key, (B, C), dtype=jnp.float32)

    out = expand_latent_space(z, WIDTH, HEIGHT)
    out = jax.block_until_ready(out)

    # Reference (plain JAX) check of the broadcast semantics.
    ref = jnp.broadcast_to(z[:, :, None, None], (B, C, WIDTH, HEIGHT))
    assert out.shape == (B, C, WIDTH, HEIGHT), out.shape
    assert out.dtype == z.dtype
    assert jnp.array_equal(out, ref), "mismatch vs reference broadcast"

    print("KERNEL_OK")
</pallas_src>

<mosaic_0001>
module attributes {stable_mosaic.version = 11 : i64} {
  func.func @_expand_kernel(%arg0: i32, %arg1: memref<8x1xf32, #tpu.memory_space<vmem>>, %arg2: memref<8x256xf32, #tpu.memory_space<vmem>>) attributes {dimension_semantics = [#tpu.dimension_semantics<parallel>], iteration_bounds = array<i64: 1>, scalar_prefetch = 0 : i64, scratch_operands = 0 : i64, tpu.core_type = #tpu.core_type<tc>, window_params = [{transform_indices = @transform_0, window_bounds = array<i64: 8, 1>}, {transform_indices = @transform_1, window_bounds = array<i64: 8, 256>}]} {
    %c0 = arith.constant 0 : index
    %c0_0 = arith.constant 0 : index
    %0 = vector.load %arg1[%c0, %c0_0] : memref<8x1xf32, #tpu.memory_space<vmem>>, vector<8x1xf32>
    %1 = vector.shape_cast %0 : vector<8x1xf32> to vector<8x1xf32>
    %2 = vector.broadcast %1 : vector<8x1xf32> to vector<8x256xf32>
    %c0_1 = arith.constant 0 : index
    %c0_2 = arith.constant 0 : index
    %3 = vector.load %arg2[%c0_1, %c0_2] : memref<8x256xf32, #tpu.memory_space<vmem>>, vector<8x256xf32>
    tpu.vector_store %arg2[%c0_1, %c0_2], %2 {strides = array<i32>} : memref<8x256xf32, #tpu.memory_space<vmem>>, vector<8x256xf32>,
    return
  }
  func.func @transform_0(%arg0: i32) -> (i32, i32) {
    %c0_i32 = arith.constant 0 : i32
    %c0_i32_0 = arith.constant 0 : i32
    return %arg0, %c0_i32 : i32, i32
  }
  func.func @transform_1(%arg0: i32) -> (i32, i32) {
    %c0_i32 = arith.constant 0 : i32
    %c0_i32_0 = arith.constant 0 : i32
    return %arg0, %c0_i32 : i32, i32
  }
}

</mosaic_0001>

<llo_original>
// kernel: tpu_custom_call.1
$region0: #{tpu_custom_call.1}
  #allocation0 [shape = 'u32[]', space=smem, size = 0x4, offset = 0x4, fixed_abs, tag = 'smem constant byte address 0x4 - core index']
  #allocation1 [shape = 'u32[144,128]{1,0:T(1,128)}', space=vmem, size = 0x12000, scoped, tag = 'internal scratch']
  %s0 = inlined_call_operand.vmem [shape: f32[8,1], index: 0, kind: input, shape index: {}]
  %s1 = inlined_call_operand.hbm [shape: f32[8,256], index: 1, kind: output, shape index: {}]
  %s2 = sld [smem:[#allocation0]]
  $region14: #{tpu_custom_call.1} parent=0
    _
  %s4 = ssub.s32 1, %s2
  %s5 = scalar_select 0, %s4, %s2
  $region1: #{tpu_custom_call.1} parent=0
    #allocation2 [shape = 'u8[8192]{0}', space=vmem, size = 0x2000, scoped, tag = 'output window, operand 0, single buffered']
    #allocation3 [shape = 's32[1]{0}', space=sflag, size = 0x4, scoped, tag = 'scoped memory for tpu_custom_call.1']
    %6 = vsyncpa [#allocation3], 0
    // Predicated region
    $region2: #{tpu_custom_call.1} parent=1 // pred_check
      _
    $region3: #{tpu_custom_call.1} parent=1 // pred_check_branch
      %8 = sbr.rel (0) target = $region5
    $region4: #{tpu_custom_call.1} parent=1 // pred_region
      _
    $region5: #{tpu_custom_call.1} parent=1 // pred_fallthru
      _
    %v9 = vld [vmem:[%s0] sm:$0xff]
    %11 = vset.pattern.permute.xlu0 0
    %12 = vperm.xlu0 %11, %v9
    %v13 = vpop.permute.xlu0 %12
    %15 = vst [vmem:[#allocation2] sm:$0xff] %v13
    %16 = vst [vmem:[#allocation2 + $0x8] sm:$0xff] %v13
    // Predicated region
    $region6: #{tpu_custom_call.1} parent=1 // pred_check
      _
    $region7: #{tpu_custom_call.1} parent=1 // pred_check_branch
      %18 = sbr.rel (0) target = $region9
    $region8: #{tpu_custom_call.1} parent=1 // pred_region
      %s20 = ssub.s32 256, 256
      %21 = vsyncadd [#allocation3], %s20
      %s23 = sshll.u32 [#allocation2], 4
      %s24 = int_to_ptr.vmem [resolvable:$true] %s23
      %26 = dma.vmem_to_hbm [thread:$0]  %s24, 256, %s1, [#allocation3]
    $region9: #{tpu_custom_call.1} parent=1 // pred_fallthru
      _
    // Predicated region
    $region10: #{tpu_custom_call.1} parent=1 // pred_check
      _
    $region11: #{tpu_custom_call.1} parent=1 // pred_check_branch
      %28 = sbr.rel (0) target = $region13
    $region12: #{tpu_custom_call.1} parent=1 // pred_region
      %29 = dma.done [#allocation3], 256
    $region13: #{tpu_custom_call.1} parent=1 // pred_fallthru
      _
    %30 = vsyncpa [#allocation3], 1

</llo_original>
